<compile_context>
chip_gen: v7x
topology: tpu7x:2x2x1
jax: 0.10.0
libtpu: 0.0.40
codegen_flags: <defaults>
</compile_context>

<pallas_src>
import functools

import jax
import jax.numpy as jnp
from jax.experimental import pallas as pl
from jax.experimental.pallas import tpu as pltpu


def _mlp_kernel(x_ref, w1_ref, b1_ref, w2_ref, b2_ref,
                w3_ref, b3_ref, w4_ref, b4_ref, o_ref):
    # fc1 + relu  (bf16 operands into the MXU, f32 accumulation)
    x = x_ref[...].astype(jnp.bfloat16)
    h1 = jnp.dot(x, w1_ref[...], preferred_element_type=jnp.float32) + b1_ref[...]
    h1 = jnp.maximum(h1, 0.0)

    # (dropout -> identity in eval)

    # fc2 + relu
    h2 = jnp.dot(h1.astype(jnp.bfloat16), w2_ref[...],
                 preferred_element_type=jnp.float32) + b2_ref[...]
    h2 = jnp.maximum(h2, 0.0)

    # fc3 + relu
    h3 = jnp.dot(h2.astype(jnp.bfloat16), w3_ref[...],
                 preferred_element_type=jnp.float32) + b3_ref[...]
    h3 = jnp.maximum(h3, 0.0)

    # fc4 + softmax over the feature axis (dim=1 of a (B, D) tensor == last axis)
    logits = jnp.dot(h3.astype(jnp.bfloat16), w4_ref[...],
                     preferred_element_type=jnp.float32) + b4_ref[...]
    m = jnp.max(logits, axis=-1, keepdims=True)
    e = jnp.exp(logits - m)
    denom = jnp.sum(e, axis=-1, keepdims=True)
    # Approx reciprocal uses the otherwise-idle EUP slot; one Newton step restores
    # full f32 accuracy essentially for free on the VPU.
    r = pl.reciprocal(denom, approx=True)
    r = r * (2.0 - denom * r)
    o_ref[...] = (e * r).astype(o_ref.dtype)


@functools.partial(jax.jit, static_argnames=("block_b",))
def predictor_forward(x, params, block_b=512):
    """x: (B, input_dim) float32. params: dict of w1..w4 (din,dout) and b1..b4 (1,dout)."""
    B, in_dim = x.shape
    out_dim = params["w4"].shape[1]

    # bf16 weights for streaming / MXU; biases stay f32 (tiny, added post-accumulation).
    ws = [params[f"w{i}"].astype(jnp.bfloat16) for i in (1, 2, 3, 4)]
    bs = [params[f"b{i}"].astype(jnp.float32) for i in (1, 2, 3, 4)]

    # Batch tiling: a single full-batch block at small B (block == full array dim is a
    # legal tile even when B is not a multiple of 8); otherwise 512-row tiles pipelined
    # over a 1-D grid with weights pinned in VMEM via constant index_maps.
    if B <= block_b:
        tb = B
        padded_b = B
    else:
        tb = block_b                       # multiple of 8 -> valid sublane tile
        padded_b = pl.cdiv(B, tb) * tb
        if padded_b != B:
            x = jnp.pad(x, ((0, padded_b - B), (0, 0)))
    grid = (padded_b // tb,)

    def _tiled(shape):        # batch-tiled operand (x / out)
        return pl.BlockSpec(shape, lambda i: (i, 0))

    def _resident(shape):     # grid-invariant operand (weights / biases): DMA'd once
        return pl.BlockSpec(shape, lambda i: (0, 0))

    in_specs = [_tiled((tb, in_dim))]
    for w, b in zip(ws, bs):
        in_specs.append(_resident(w.shape))
        in_specs.append(_resident(b.shape))

    out = pl.pallas_call(
        _mlp_kernel,
        out_shape=jax.ShapeDtypeStruct((padded_b, out_dim), jnp.float32),
        grid=grid,
        in_specs=in_specs,
        out_specs=_tiled((tb, out_dim)),
        compiler_params=pltpu.CompilerParams(
            # Batch axis is embarrassingly parallel -> shards across the 2 TCs on v7x.
            dimension_semantics=("parallel",),
        ),
    )(x, ws[0], bs[0], ws[1], bs[1], ws[2], bs[2], ws[3], bs[3])

    if padded_b != B:
        out = out[:B]
    return out


def init_params(key, input_dim=22, output_dim=8):
    dims = [(input_dim, 256), (256, 128), (128, 64), (64, output_dim)]
    params = {}
    keys = jax.random.split(key, len(dims) * 2)
    for i, (din, dout) in enumerate(dims):
        bound = 1.0 / (din ** 0.5)  # same fan-in uniform init as nn.Linear
        w = jax.random.uniform(keys[2 * i], (din, dout), jnp.float32, -bound, bound)
        b = jax.random.uniform(keys[2 * i + 1], (1, dout), jnp.float32, -bound, bound)
        params[f"w{i + 1}"] = w
        params[f"b{i + 1}"] = b
    return params


def _reference_forward_bf16(x, params):
    """Mirrors the kernel math (bf16 MXU inputs, f32 accumulate)."""
    def dense(h, w, b):
        return jnp.dot(h.astype(jnp.bfloat16), w.astype(jnp.bfloat16),
                       preferred_element_type=jnp.float32) + b
    h = jnp.maximum(dense(x, params["w1"], params["b1"]), 0.0)
    h = jnp.maximum(dense(h, params["w2"], params["b2"]), 0.0)
    h = jnp.maximum(dense(h, params["w3"], params["b3"]), 0.0)
    logits = dense(h, params["w4"], params["b4"])
    return jax.nn.softmax(logits, axis=1)


def _reference_forward_f32(x, params):
    h = jnp.maximum(x @ params["w1"] + params["b1"], 0.0)
    h = jnp.maximum(h @ params["w2"] + params["b2"], 0.0)
    h = jnp.maximum(h @ params["w3"] + params["b3"], 0.0)
    logits = h @ params["w4"] + params["b4"]
    return jax.nn.softmax(logits, axis=1)


if __name__ == "__main__":
    key = jax.random.PRNGKey(0)
    k_params, k_x = jax.random.split(key)

    B, INPUT_DIM, OUTPUT_DIM = 8, 22, 8
    params = init_params(k_params, INPUT_DIM, OUTPUT_DIM)
    x = jax.random.normal(k_x, (B, INPUT_DIM), jnp.float32)

    out = predictor_forward(x, params)
    out = jax.block_until_ready(out)
    assert out.shape == (B, OUTPUT_DIM)

    # Tight check vs a reference that mirrors the kernel's bf16-weight math.
    ref_bf16 = _reference_forward_bf16(x, params)
    assert jnp.allclose(out, ref_bf16, atol=1e-4, rtol=1e-4), \
        float(jnp.max(jnp.abs(out - ref_bf16)))

    # Looser semantic check vs the pure-f32 PyTorch-equivalent forward.
    ref_f32 = _reference_forward_f32(x, params)
    assert jnp.allclose(out, ref_f32, atol=2e-2), \
        float(jnp.max(jnp.abs(out - ref_f32)))

    # Softmax rows sum to 1.
    assert jnp.allclose(jnp.sum(out, axis=1), jnp.ones((B,)), atol=1e-5)

    # Exercise the multi-tile (grid > 1, padded-batch) path as well.
    B2 = 1030
    x2 = jax.random.normal(jax.random.PRNGKey(1), (B2, INPUT_DIM), jnp.float32)
    out2 = jax.block_until_ready(predictor_forward(x2, params))
    assert out2.shape == (B2, OUTPUT_DIM)
    ref2 = _reference_forward_bf16(x2, params)
    assert jnp.allclose(out2, ref2, atol=1e-4, rtol=1e-4), \
        float(jnp.max(jnp.abs(out2 - ref2)))

    print("KERNEL_OK")
</pallas_src>

<mosaic_0001>
module attributes {stable_mosaic.version = 11 : i64} {
  func.func @_mlp_kernel(%arg0: i32, %arg1: memref<8x22xf32, #tpu.memory_space<vmem>>, %arg2: memref<22x256xbf16, #tpu.memory_space<vmem>>, %arg3: memref<1x256xf32, #tpu.memory_space<vmem>>, %arg4: memref<256x128xbf16, #tpu.memory_space<vmem>>, %arg5: memref<1x128xf32, #tpu.memory_space<vmem>>, %arg6: memref<128x64xbf16, #tpu.memory_space<vmem>>, %arg7: memref<1x64xf32, #tpu.memory_space<vmem>>, %arg8: memref<64x8xbf16, #tpu.memory_space<vmem>>, %arg9: memref<1x8xf32, #tpu.memory_space<vmem>>, %arg10: memref<8x8xf32, #tpu.memory_space<vmem>>) attributes {dimension_semantics = [#tpu.dimension_semantics<parallel>], iteration_bounds = array<i64: 1>, scalar_prefetch = 0 : i64, scratch_operands = 0 : i64, tpu.core_type = #tpu.core_type<tc>, window_params = [{transform_indices = @transform_0, window_bounds = array<i64: 8, 22>}, {pipeline_mode = #tpu.pipeline_mode<synchronous>, transform_indices = @transform_1, window_bounds = array<i64: 22, 256>}, {pipeline_mode = #tpu.pipeline_mode<synchronous>, transform_indices = @transform_2, window_bounds = array<i64: 1, 256>}, {pipeline_mode = #tpu.pipeline_mode<synchronous>, transform_indices = @transform_3, window_bounds = array<i64: 256, 128>}, {pipeline_mode = #tpu.pipeline_mode<synchronous>, transform_indices = @transform_4, window_bounds = array<i64: 1, 128>}, {pipeline_mode = #tpu.pipeline_mode<synchronous>, transform_indices = @transform_5, window_bounds = array<i64: 128, 64>}, {pipeline_mode = #tpu.pipeline_mode<synchronous>, transform_indices = @transform_6, window_bounds = array<i64: 1, 64>}, {pipeline_mode = #tpu.pipeline_mode<synchronous>, transform_indices = @transform_7, window_bounds = array<i64: 64, 8>}, {pipeline_mode = #tpu.pipeline_mode<synchronous>, transform_indices = @transform_8, window_bounds = array<i64: 1, 8>}, {transform_indices = @transform_9, window_bounds = array<i64: 8, 8>}]} {
    %c0 = arith.constant 0 : index
    %c0_0 = arith.constant 0 : index
    %0 = vector.load %arg1[%c0, %c0_0] : memref<8x22xf32, #tpu.memory_space<vmem>>, vector<8x22xf32>
    %1 = arith.truncf %0 : vector<8x22xf32> to vector<8x22xbf16>
    %c0_1 = arith.constant 0 : index
    %c0_2 = arith.constant 0 : index
    %2 = vector.load %arg2[%c0_1, %c0_2] : memref<22x256xbf16, #tpu.memory_space<vmem>>, vector<22x256xbf16>
    %cst = arith.constant dense<0.000000e+00> : vector<8x256xf32>
    %3 = tpu.matmul %1, %2, %cst {dimension_numbers = #tpu.dot_dimension_numbers<[1], [0], [0], [1], [0, 0, 1, 1], [], []>} : vector<8x22xbf16>, vector<22x256xbf16>, vector<8x256xf32> -> vector<8x256xf32>
    %c0_3 = arith.constant 0 : index
    %c0_4 = arith.constant 0 : index
    %4 = vector.load %arg3[%c0_3, %c0_4] : memref<1x256xf32, #tpu.memory_space<vmem>>, vector<1x256xf32>
    %5 = vector.broadcast %4 : vector<1x256xf32> to vector<8x256xf32>
    %6 = arith.addf %3, %5 : vector<8x256xf32>
    %cst_5 = arith.constant 0.000000e+00 : f32
    %7 = vector.broadcast %cst_5 : f32 to vector<8x256xf32>
    %8 = arith.maximumf %6, %7 : vector<8x256xf32>
    %9 = arith.truncf %8 : vector<8x256xf32> to vector<8x256xbf16>
    %c0_6 = arith.constant 0 : index
    %c0_7 = arith.constant 0 : index
    %10 = vector.load %arg4[%c0_6, %c0_7] : memref<256x128xbf16, #tpu.memory_space<vmem>>, vector<256x128xbf16>
    %cst_8 = arith.constant dense<0.000000e+00> : vector<8x128xf32>
    %11 = tpu.matmul %9, %10, %cst_8 {dimension_numbers = #tpu.dot_dimension_numbers<[1], [0], [0], [1], [0, 0, 1, 1], [], []>} : vector<8x256xbf16>, vector<256x128xbf16>, vector<8x128xf32> -> vector<8x128xf32>
    %c0_9 = arith.constant 0 : index
    %c0_10 = arith.constant 0 : index
    %12 = vector.load %arg5[%c0_9, %c0_10] : memref<1x128xf32, #tpu.memory_space<vmem>>, vector<1x128xf32>
    %13 = vector.broadcast %12 : vector<1x128xf32> to vector<8x128xf32>
    %14 = arith.addf %11, %13 : vector<8x128xf32>
    %cst_11 = arith.constant 0.000000e+00 : f32
    %15 = vector.broadcast %cst_11 : f32 to vector<8x128xf32>
    %16 = arith.maximumf %14, %15 : vector<8x128xf32>
    %17 = arith.truncf %16 : vector<8x128xf32> to vector<8x128xbf16>
    %c0_12 = arith.constant 0 : index
    %c0_13 = arith.constant 0 : index
    %18 = vector.load %arg6[%c0_12, %c0_13] : memref<128x64xbf16, #tpu.memory_space<vmem>>, vector<128x64xbf16>
    %cst_14 = arith.constant dense<0.000000e+00> : vector<8x64xf32>
    %19 = tpu.matmul %17, %18, %cst_14 {dimension_numbers = #tpu.dot_dimension_numbers<[1], [0], [0], [1], [0, 0, 1, 1], [], []>} : vector<8x128xbf16>, vector<128x64xbf16>, vector<8x64xf32> -> vector<8x64xf32>
    %c0_15 = arith.constant 0 : index
    %c0_16 = arith.constant 0 : index
    %20 = vector.load %arg7[%c0_15, %c0_16] : memref<1x64xf32, #tpu.memory_space<vmem>>, vector<1x64xf32>
    %21 = vector.broadcast %20 : vector<1x64xf32> to vector<8x64xf32>
    %22 = arith.addf %19, %21 : vector<8x64xf32>
    %cst_17 = arith.constant 0.000000e+00 : f32
    %23 = vector.broadcast %cst_17 : f32 to vector<8x64xf32>
    %24 = arith.maximumf %22, %23 : vector<8x64xf32>
    %25 = arith.truncf %24 : vector<8x64xf32> to vector<8x64xbf16>
    %c0_18 = arith.constant 0 : index
    %c0_19 = arith.constant 0 : index
    %26 = vector.load %arg8[%c0_18, %c0_19] : memref<64x8xbf16, #tpu.memory_space<vmem>>, vector<64x8xbf16>
    %cst_20 = arith.constant dense<0.000000e+00> : vector<8x8xf32>
    %27 = tpu.matmul %25, %26, %cst_20 {dimension_numbers = #tpu.dot_dimension_numbers<[1], [0], [0], [1], [0, 0, 1, 1], [], []>} : vector<8x64xbf16>, vector<64x8xbf16>, vector<8x8xf32> -> vector<8x8xf32>
    %c0_21 = arith.constant 0 : index
    %c0_22 = arith.constant 0 : index
    %28 = vector.load %arg9[%c0_21, %c0_22] : memref<1x8xf32, #tpu.memory_space<vmem>>, vector<1x8xf32>
    %29 = vector.broadcast %28 : vector<1x8xf32> to vector<8x8xf32>
    %30 = arith.addf %27, %29 : vector<8x8xf32>
    %cst_23 = arith.constant dense<0xFF800000> : vector<8xf32>
    %31 = vector.multi_reduction <maximumf>, %30, %cst_23 [1] : vector<8x8xf32> to vector<8xf32>
    %32 = vector.shape_cast %31 : vector<8xf32> to vector<8x1xf32>
    %33 = vector.broadcast %32 : vector<8x1xf32> to vector<8x8xf32>
    %34 = arith.subf %30, %33 : vector<8x8xf32>
    %35 = math.exp %34 : vector<8x8xf32>
    %cst_24 = arith.constant dense<0.000000e+00> : vector<8xf32>
    %36 = vector.multi_reduction <add>, %35, %cst_24 [1] : vector<8x8xf32> to vector<8xf32>
    %37 = vector.shape_cast %36 : vector<8xf32> to vector<8x1xf32>
    %38 = tpu.reciprocal %37 {approx = true} : vector<8x1xf32> -> vector<8x1xf32>
    %39 = arith.mulf %37, %38 : vector<8x1xf32>
    %cst_25 = arith.constant 2.000000e+00 : f32
    %40 = vector.broadcast %cst_25 : f32 to vector<8x1xf32>
    %41 = arith.subf %40, %39 : vector<8x1xf32>
    %42 = arith.mulf %38, %41 : vector<8x1xf32>
    %43 = vector.broadcast %42 : vector<8x1xf32> to vector<8x8xf32>
    %44 = arith.mulf %35, %43 : vector<8x8xf32>
    %c0_26 = arith.constant 0 : index
    %c0_27 = arith.constant 0 : index
    %45 = vector.load %arg10[%c0_26, %c0_27] : memref<8x8xf32, #tpu.memory_space<vmem>>, vector<8x8xf32>
    tpu.vector_store %arg10[%c0_26, %c0_27], %44 {strides = array<i32>} : memref<8x8xf32, #tpu.memory_space<vmem>>, vector<8x8xf32>,
    return
  }
  func.func @transform_0(%arg0: i32) -> (i32, i32) {
    %c0_i32 = arith.constant 0 : i32
    %c0_i32_0 = arith.constant 0 : i32
    return %arg0, %c0_i32 : i32, i32
  }
  func.func @transform_1(%arg0: i32) -> (i32, i32) {
    %c0_i32 = arith.constant 0 : i32
    %c0_i32_0 = arith.constant 0 : i32
    %c0_i32_1 = arith.constant 0 : i32
    return %c0_i32, %c0_i32_0 : i32, i32
  }
  func.func @transform_2(%arg0: i32) -> (i32, i32) {
    %c0_i32 = arith.constant 0 : i32
    %c0_i32_0 = arith.constant 0 : i32
    %c0_i32_1 = arith.constant 0 : i32
    return %c0_i32, %c0_i32_0 : i32, i32
  }
  func.func @transform_3(%arg0: i32) -> (i32, i32) {
    %c0_i32 = arith.constant 0 : i32
    %c0_i32_0 = arith.constant 0 : i32
    %c0_i32_1 = arith.constant 0 : i32
    return %c0_i32, %c0_i32_0 : i32, i32
  }
  func.func @transform_4(%arg0: i32) -> (i32, i32) {
    %c0_i32 = arith.constant 0 : i32
    %c0_i32_0 = arith.constant 0 : i32
    %c0_i32_1 = arith.constant 0 : i32
    return %c0_i32, %c0_i32_0 : i32, i32
  }
  func.func @transform_5(%arg0: i32) -> (i32, i32) {
    %c0_i32 = arith.constant 0 : i32
    %c0_i32_0 = arith.constant 0 : i32
    %c0_i32_1 = arith.constant 0 : i32
    return %c0_i32, %c0_i32_0 : i32, i32
  }
  func.func @transform_6(%arg0: i32) -> (i32, i32) {
    %c0_i32 = arith.constant 0 : i32
    %c0_i32_0 = arith.constant 0 : i32
    %c0_i32_1 = arith.constant 0 : i32
    return %c0_i32, %c0_i32_0 : i32, i32
  }
  func.func @transform_7(%arg0: i32) -> (i32, i32) {
    %c0_i32 = arith.constant 0 : i32
    %c0_i32_0 = arith.constant 0 : i32
    %c0_i32_1 = arith.constant 0 : i32
    return %c0_i32, %c0_i32_0 : i32, i32
  }
  func.func @transform_8(%arg0: i32) -> (i32, i32) {
    %c0_i32 = arith.constant 0 : i32
    %c0_i32_0 = arith.constant 0 : i32
    %c0_i32_1 = arith.constant 0 : i32
    return %c0_i32, %c0_i32_0 : i32, i32
  }
  func.func @transform_9(%arg0: i32) -> (i32, i32) {
    %c0_i32 = arith.constant 0 : i32
    %c0_i32_0 = arith.constant 0 : i32
    return %arg0, %c0_i32 : i32, i32
  }
}

</mosaic_0001>

<llo_original>
// kernel: predictor_forward.1
$region0: #{predictor_forward.1}
  #allocation0 [shape = 'u32[]', space=smem, size = 0x4, offset = 0x4, fixed_abs, tag = 'smem constant byte address 0x4 - core index']
  #allocation1 [shape = 'u32[144,128]{1,0:T(1,128)}', space=vmem, size = 0x12000, scoped, tag = 'internal scratch']
  %s0 = inlined_call_operand.vmem [shape: f32[8,22], index: 0, kind: input, shape index: {}]
  %s1 = inlined_call_operand.vmem [shape: bf16[22,256], index: 1, kind: input, shape index: {}]
  %s2 = inlined_call_operand.vmem [shape: f32[1,256], index: 2, kind: input, shape index: {}]
  %s3 = inlined_call_operand.vmem [shape: bf16[256,128], index: 3, kind: input, shape index: {}]
  %s4 = inlined_call_operand.vmem [shape: f32[1,128], index: 4, kind: input, shape index: {}]
  %s5 = inlined_call_operand.vmem [shape: bf16[128,64], index: 5, kind: input, shape index: {}]
  %s6 = inlined_call_operand.vmem [shape: f32[1,64], index: 6, kind: input, shape index: {}]
  %s7 = inlined_call_operand.vmem [shape: bf16[64,8], index: 7, kind: input, shape index: {}]
  %s8 = inlined_call_operand.vmem [shape: f32[1,8], index: 8, kind: input, shape index: {}]
  %s9 = inlined_call_operand.hbm [shape: f32[8,8], index: 9, kind: output, shape index: {}]
  %s10 = sld [smem:[#allocation0]]
  $region46: #{predictor_forward.1} parent=0
    _
  %s12 = ssub.s32 1, %s10
  %s13 = scalar_select 0, %s12, %s10
  $region1: #{predictor_forward.1} parent=0
    #allocation2 [shape = 'u8[4096]{0}', space=vmem, size = 0x1000, scoped, tag = 'output window, operand 0, single buffered']
    #allocation3 [shape = 's32[1]{0}', space=sflag, size = 0x4, scoped, tag = 'scoped memory for predictor_forward.1']
    %14 = vsyncpa [#allocation3], 0
    // Predicated region
    $region2: #{predictor_forward.1} parent=1 // pred_check
      _
    $region3: #{predictor_forward.1} parent=1 // pred_check_branch
      %16 = sbr.rel (0) target = $region5
    $region4: #{predictor_forward.1} parent=1 // pred_region
      _
    $region5: #{predictor_forward.1} parent=1 // pred_fallthru
      _
    // Predicated region
    $region6: #{predictor_forward.1} parent=1 // pred_check
      _
    $region7: #{predictor_forward.1} parent=1 // pred_check_branch
      %18 = sbr.rel (0) target = $region9
    $region8: #{predictor_forward.1} parent=1 // pred_region
      _
    $region9: #{predictor_forward.1} parent=1 // pred_fallthru
      _
    // Predicated region
    $region10: #{predictor_forward.1} parent=1 // pred_check
      _
    $region11: #{predictor_forward.1} parent=1 // pred_check_branch
      %20 = sbr.rel (0) target = $region13
    $region12: #{predictor_forward.1} parent=1 // pred_region
      _
    $region13: #{predictor_forward.1} parent=1 // pred_fallthru
      _
    // Predicated region
    $region14: #{predictor_forward.1} parent=1 // pred_check
      _
    $region15: #{predictor_forward.1} parent=1 // pred_check_branch
      %22 = sbr.rel (0) target = $region17
    $region16: #{predictor_forward.1} parent=1 // pred_region
      _
    $region17: #{predictor_forward.1} parent=1 // pred_fallthru
      _
    // Predicated region
    $region18: #{predictor_forward.1} parent=1 // pred_check
      _
    $region19: #{predictor_forward.1} parent=1 // pred_check_branch
      %24 = sbr.rel (0) target = $region21
    $region20: #{predictor_forward.1} parent=1 // pred_region
      _
    $region21: #{predictor_forward.1} parent=1 // pred_fallthru
      _
    // Predicated region
    $region22: #{predictor_forward.1} parent=1 // pred_check
      _
    $region23: #{predictor_forward.1} parent=1 // pred_check_branch
      %26 = sbr.rel (0) target = $region25
    $region24: #{predictor_forward.1} parent=1 // pred_region
      _
    $region25: #{predictor_forward.1} parent=1 // pred_fallthru
      _
    // Predicated region
    $region26: #{predictor_forward.1} parent=1 // pred_check
      _
    $region27: #{predictor_forward.1} parent=1 // pred_check_branch
      %28 = sbr.rel (0) target = $region29
    $region28: #{predictor_forward.1} parent=1 // pred_region
      _
    $region29: #{predictor_forward.1} parent=1 // pred_fallthru
      _
    // Predicated region
    $region30: #{predictor_forward.1} parent=1 // pred_check
      _
    $region31: #{predictor_forward.1} parent=1 // pred_check_branch
      %30 = sbr.rel (0) target = $region33
    $region32: #{predictor_forward.1} parent=1 // pred_region
      _
    $region33: #{predictor_forward.1} parent=1 // pred_fallthru
      _
    // Predicated region
    $region34: #{predictor_forward.1} parent=1 // pred_check
      _
    $region35: #{predictor_forward.1} parent=1 // pred_check_branch
      %32 = sbr.rel (0) target = $region37
    $region36: #{predictor_forward.1} parent=1 // pred_region
      _
    $region37: #{predictor_forward.1} parent=1 // pred_fallthru
      _
    %v34 = vld [vmem:[%s0] sm:$0xff]
    %v35 = vpack.c.bf16 %v34, %v34
    %v36 = vld [vmem:[%s1] sm:$0xff]
    %v37 = vld [vmem:[%s1 + $0x8] sm:$0xff]
    %v38 = vld [vmem:[%s1 + $0x10] sm:$0x77]
    %v39 = vld [vmem:[%s2] sm:$0x3]
    %v41 = vlaneseq
    %v42 = vshrl.u32 %v41, 7
    %v43 = vsub.s32 0, %v42
    %v44 = vrot.slane %v39, %v43
    %v45 = vlaneseq
    %v46 = vshrl.u32 %v45, 7
    %v47 = vsub.s32 1, %v46
    %v48 = vrot.slane %v39, %v47
    %v54 = vunpack.c.l.b16 %v36
    %v55 = vunpack.c.h.b16 %v36
    %v56 = vunpack.c.l.b16 %v37
    %v57 = vunpack.c.h.b16 %v37
    %v58 = vunpack.c.l.b16 %v38
    %v59 = vunpack.c.h.b16 %v38
    %v60 = vpack.c.b16 %v56, %v54
    %v61 = vpack.c.b16 %v57, %v55
    %v62 = vpack.c.b16 %v58, %v58
    %v63 = vpack.c.b16 %v59, %v59
    %vm66 = vcmask 179200
    %v68 = vsel %vm66, %v35, 0
    %vm70 = vcmask 1042432
    %v72 = vsel %vm70, %v62, 0
    %v75 = vsel %vm70, %v63, 0
    %77 = vmatprep.subr.bf16.mxu0 %v61
    %78 = vmatpush1.bf16.msra.mxu0 %v60
    %79 = vmatprep.subr.bf16.mxu0 %v75
    %80 = vmatpush1.bf16.msra.mxu0 %v72
    %81 = vmatprep.subr.bf16.mxu0 0
    %82 = vmatpush1.bf16.msra.mxu0 0
    %83 = vmatprep.subr.bf16.mxu0 0
    %84 = vmatpush1.bf16.msra.mxu0 0
    %85 = vmatprep.subr.bf16.mxu0 0
    %86 = vmatpush1.bf16.msra.mxu0 0
    %87 = vmatprep.subr.bf16.mxu0 0
    %88 = vmatpush1.bf16.msra.mxu0 0
    %89 = vmatprep.subr.bf16.mxu0 0
    %90 = vmatpush1.bf16.msra.mxu0 0
    %91 = vmatprep.subr.bf16.mxu0 0
    %92 = vmatpush1.bf16.msra.mxu0 0
    %93 = vmatprep.subr.bf16.mxu0 0
    %94 = vmatpush1.bf16.msra.mxu0 0
    %95 = vmatprep.subr.bf16.mxu0 0
    %96 = vmatpush1.bf16.msra.mxu0 0
    %97 = vmatprep.subr.bf16.mxu0 0
    %98 = vmatpush1.bf16.msra.mxu0 0
    %99 = vmatprep.subr.bf16.mxu0 0
    %100 = vmatpush1.bf16.msra.mxu0 0
    %101 = vmatprep.subr.bf16.mxu0 0
    %102 = vmatpush1.bf16.msra.mxu0 0
    %103 = vmatprep.subr.bf16.mxu0 0
    %104 = vmatpush1.bf16.msra.mxu0 0
    %105 = vmatprep.subr.bf16.mxu0 0
    %106 = vmatpush1.bf16.msra.mxu0 0
    %107 = vmatprep.subr.bf16.mxu0 0
    %108 = vmatpush1.bf16.msra.mxu0 0
    %109 = vmatprep.mubr.bf16.mxu0 0
    %110 = vmatmul.mubr.bf16.gmra.mrb[0].mxu0 %v68
    %v111 = vpop.f32.mrb[0].mxu0
    %v112 = vadd.f32 %v44, %v111
    %v113 = vpop.f32.mrb[0].mxu0
    %v114 = vadd.f32 %v48, %v113
    %v115 = vpop.f32.mrb[0].mxu0
    %v116 = vpop.f32.mrb[0].mxu0
    %117 = vdwg.mxu0
    %v118 = vmax.f32 %v112, 0.0
    %v119 = vmax.f32 %v114, 0.0
    %v120 = vpack.c.bf16 %v118, %v118
    %v121 = vpack.c.bf16 %v119, %v119
    %v122 = vld [vmem:[%s3] sm:$0xf]
    %v123 = vld [vmem:[%s3 + $0x4] sm:$0xf]
    %v124 = vld [vmem:[%s3 + $0x8] sm:$0xf]
    %v125 = vld [vmem:[%s3 + $0xc] sm:$0xf]
    %v126 = vld [vmem:[%s3 + $0x10] sm:$0xf]
    %v127 = vld [vmem:[%s3 + $0x14] sm:$0xf]
    %v128 = vld [vmem:[%s3 + $0x18] sm:$0xf]
    %v129 = vld [vmem:[%s3 + $0x1c] sm:$0xf]
    %v130 = vld [vmem:[%s3 + $0x20] sm:$0xf]
    %v131 = vld [vmem:[%s3 + $0x24] sm:$0xf]
    %v132 = vld [vmem:[%s3 + $0x28] sm:$0xf]
    %v133 = vld [vmem:[%s3 + $0x2c] sm:$0xf]
    %v134 = vld [vmem:[%s3 + $0x30] sm:$0xf]
    %v135 = vld [vmem:[%s3 + $0x34] sm:$0xf]
    %v136 = vld [vmem:[%s3 + $0x38] sm:$0xf]
    %v137 = vld [vmem:[%s3 + $0x3c] sm:$0xf]
    %v138 = vld [vmem:[%s3 + $0x40] sm:$0xf]
    %v139 = vld [vmem:[%s3 + $0x44] sm:$0xf]
    %v140 = vld [vmem:[%s3 + $0x48] sm:$0xf]
    %v141 = vld [vmem:[%s3 + $0x4c] sm:$0xf]
    %v142 = vld [vmem:[%s3 + $0x50] sm:$0xf]
    %v143 = vld [vmem:[%s3 + $0x54] sm:$0xf]
    %v144 = vld [vmem:[%s3 + $0x58] sm:$0xf]
    %v145 = vld [vmem:[%s3 + $0x5c] sm:$0xf]
    %v146 = vld [vmem:[%s3 + $0x60] sm:$0xf]
    %v147 = vld [vmem:[%s3 + $0x64] sm:$0xf]
    %v148 = vld [vmem:[%s3 + $0x68] sm:$0xf]
    %v149 = vld [vmem:[%s3 + $0x6c] sm:$0xf]
    %v150 = vld [vmem:[%s3 + $0x70] sm:$0xf]
    %v151 = vld [vmem:[%s3 + $0x74] sm:$0xf]
    %v152 = vld [vmem:[%s3 + $0x78] sm:$0xf]
    %v153 = vld [vmem:[%s3 + $0x7c] sm:$0xf]
    %v154 = vld [vmem:[%s4] sm:$0x1]
    %v156 = vlaneseq
    %v157 = vshrl.u32 %v156, 7
    %v158 = vsub.s32 0, %v157
    %v159 = vrot.slane %v154, %v158
    %v193 = vunpack.c.l.b16 %v122
    %v194 = vunpack.c.l.b16 %v123
    %v195 = vunpack.c.l.b16 %v124
    %v196 = vunpack.c.l.b16 %v125
    %v197 = vunpack.c.l.b16 %v126
    %v198 = vunpack.c.l.b16 %v127
    %v199 = vunpack.c.l.b16 %v128
    %v200 = vunpack.c.l.b16 %v129
    %v201 = vunpack.c.l.b16 %v130
    %v202 = vunpack.c.l.b16 %v131
    %v203 = vunpack.c.l.b16 %v132
    %v204 = vunpack.c.l.b16 %v133
    %v205 = vunpack.c.l.b16 %v134
    %v206 = vunpack.c.l.b16 %v135
    %v207 = vunpack.c.l.b16 %v136
    %v208 = vunpack.c.l.b16 %v137
    %v209 = vunpack.c.l.b16 %v138
    %v210 = vunpack.c.l.b16 %v139
    %v211 = vunpack.c.l.b16 %v140
    %v212 = vunpack.c.l.b16 %v141
    %v213 = vunpack.c.l.b16 %v142
    %v214 = vunpack.c.l.b16 %v143
    %v215 = vunpack.c.l.b16 %v144
    %v216 = vunpack.c.l.b16 %v145
    %v217 = vunpack.c.l.b16 %v146
    %v218 = vunpack.c.l.b16 %v147
    %v219 = vunpack.c.l.b16 %v148
    %v220 = vunpack.c.l.b16 %v149
    %v221 = vunpack.c.l.b16 %v150
    %v222 = vunpack.c.l.b16 %v151
    %v223 = vunpack.c.l.b16 %v152
    %v224 = vunpack.c.l.b16 %v153
    %v225 = vpack.c.b16 %v194, %v193
    %v226 = vpack.c.b16 %v196, %v195
    %v227 = vpack.c.b16 %v198, %v197
    %v228 = vpack.c.b16 %v200, %v199
    %v229 = vpack.c.b16 %v202, %v201
    %v230 = vpack.c.b16 %v204, %v203
    %v231 = vpack.c.b16 %v206, %v205
    %v232 = vpack.c.b16 %v208, %v207
    %v233 = vpack.c.b16 %v210, %v209
    %v234 = vpack.c.b16 %v212, %v211
    %v235 = vpack.c.b16 %v214, %v213
    %v236 = vpack.c.b16 %v216, %v215
    %v237 = vpack.c.b16 %v218, %v217
    %v238 = vpack.c.b16 %v220, %v219
    %v239 = vpack.c.b16 %v222, %v221
    %v240 = vpack.c.b16 %v224, %v223
    %257 = vmatprep.subr.bf16.mxu0 0
    %258 = vmatpush1.bf16.msra.mxu0 %v225
    %259 = vmatprep.subr.bf16.mxu0 0
    %260 = vmatpush1.bf16.msra.mxu0 %v226
    %261 = vmatprep.subr.bf16.mxu0 0
    %262 = vmatpush1.bf16.msra.mxu0 %v227
    %263 = vmatprep.subr.bf16.mxu0 0
    %264 = vmatpush1.bf16.msra.mxu0 %v228
    %265 = vmatprep.subr.bf16.mxu0 0
    %266 = vmatpush1.bf16.msra.mxu0 %v229
    %267 = vmatprep.subr.bf16.mxu0 0
    %268 = vmatpush1.bf16.msra.mxu0 %v230
    %269 = vmatprep.subr.bf16.mxu0 0
    %270 = vmatpush1.bf16.msra.mxu0 %v231
    %271 = vmatprep.subr.bf16.mxu0 0
    %272 = vmatpush1.bf16.msra.mxu0 %v232
    %273 = vmatprep.subr.bf16.mxu0 0
    %274 = vmatpush1.bf16.msra.mxu0 %v233
    %275 = vmatprep.subr.bf16.mxu0 0
    %276 = vmatpush1.bf16.msra.mxu0 %v234
    %277 = vmatprep.subr.bf16.mxu0 0
    %278 = vmatpush1.bf16.msra.mxu0 %v235
    %279 = vmatprep.subr.bf16.mxu0 0
    %280 = vmatpush1.bf16.msra.mxu0 %v236
    %281 = vmatprep.subr.bf16.mxu0 0
    %282 = vmatpush1.bf16.msra.mxu0 %v237
    %283 = vmatprep.subr.bf16.mxu0 0
    %284 = vmatpush1.bf16.msra.mxu0 %v238
    %285 = vmatprep.subr.bf16.mxu0 0
    %286 = vmatpush1.bf16.msra.mxu0 %v239
    %287 = vmatprep.subr.bf16.mxu0 0
    %288 = vmatpush1.bf16.msra.mxu0 %v240
    %289 = vmatprep.mubr.bf16.mxu0 %v121
    %290 = vmatmul.mubr.bf16.gmra.mrb[0].mxu0 %v120
    %v291 = vpop.f32.mrb[0].mxu0
    %v292 = vadd.f32 %v159, %v291
    %v293 = vpop.f32.mrb[0].mxu0
    %v294 = vpop.f32.mrb[0].mxu0
    %v295 = vpop.f32.mrb[0].mxu0
    %296 = vdwg.mxu0
    %v297 = vmax.f32 %v292, 0.0
    %v298 = vpack.c.bf16 %v297, %v297
    %v299 = vld [vmem:[%s5] sm:$0xf]
    %v300 = vld [vmem:[%s5 + $0x4] sm:$0xf]
    %v301 = vld [vmem:[%s5 + $0x8] sm:$0xf]
    %v302 = vld [vmem:[%s5 + $0xc] sm:$0xf]
    %v303 = vld [vmem:[%s5 + $0x10] sm:$0xf]
    %v304 = vld [vmem:[%s5 + $0x14] sm:$0xf]
    %v305 = vld [vmem:[%s5 + $0x18] sm:$0xf]
    %v306 = vld [vmem:[%s5 + $0x1c] sm:$0xf]
    %v307 = vld [vmem:[%s5 + $0x20] sm:$0xf]
    %v308 = vld [vmem:[%s5 + $0x24] sm:$0xf]
    %v309 = vld [vmem:[%s5 + $0x28] sm:$0xf]
    %v310 = vld [vmem:[%s5 + $0x2c] sm:$0xf]
    %v311 = vld [vmem:[%s5 + $0x30] sm:$0xf]
    %v312 = vld [vmem:[%s5 + $0x34] sm:$0xf]
    %v313 = vld [vmem:[%s5 + $0x38] sm:$0xf]
    %v314 = vld [vmem:[%s5 + $0x3c] sm:$0xf]
    %v315 = vld [vmem:[%s6] sm:$0x1]
    %v317 = vlaneseq
    %v318 = vshrl.u32 %v317, 7
    %v319 = vsub.s32 0, %v318
    %v320 = vrot.slane %v315, %v319
    %v338 = vunpack.c.l.b16 %v299
    %v339 = vunpack.c.l.b16 %v300
    %v340 = vunpack.c.l.b16 %v301
    %v341 = vunpack.c.l.b16 %v302
    %v342 = vunpack.c.l.b16 %v303
    %v343 = vunpack.c.l.b16 %v304
    %v344 = vunpack.c.l.b16 %v305
    %v345 = vunpack.c.l.b16 %v306
    %v346 = vunpack.c.l.b16 %v307
    %v347 = vunpack.c.l.b16 %v308
    %v348 = vunpack.c.l.b16 %v309
    %v349 = vunpack.c.l.b16 %v310
    %v350 = vunpack.c.l.b16 %v311
    %v351 = vunpack.c.l.b16 %v312
    %v352 = vunpack.c.l.b16 %v313
    %v353 = vunpack.c.l.b16 %v314
    %v354 = vpack.c.b16 %v339, %v338
    %v355 = vpack.c.b16 %v341, %v340
    %v356 = vpack.c.b16 %v343, %v342
    %v357 = vpack.c.b16 %v345, %v344
    %v358 = vpack.c.b16 %v347, %v346
    %v359 = vpack.c.b16 %v349, %v348
    %v360 = vpack.c.b16 %v351, %v350
    %v361 = vpack.c.b16 %v353, %v352
    %370 = vmatprep.subr.bf16.mxu0 0
    %371 = vmatpush1.bf16.msra.mxu0 %v354
    %372 = vmatprep.subr.bf16.mxu0 0
    %373 = vmatpush1.bf16.msra.mxu0 %v355
    %374 = vmatprep.subr.bf16.mxu0 0
    %375 = vmatpush1.bf16.msra.mxu0 %v356
    %376 = vmatprep.subr.bf16.mxu0 0
    %377 = vmatpush1.bf16.msra.mxu0 %v357
    %378 = vmatprep.subr.bf16.mxu0 0
    %379 = vmatpush1.bf16.msra.mxu0 %v358
    %380 = vmatprep.subr.bf16.mxu0 0
    %381 = vmatpush1.bf16.msra.mxu0 %v359
    %382 = vmatprep.subr.bf16.mxu0 0
    %383 = vmatpush1.bf16.msra.mxu0 %v360
    %384 = vmatprep.subr.bf16.mxu0 0
    %385 = vmatpush1.bf16.msra.mxu0 %v361
    %386 = vmatprep.subr.bf16.mxu0 0
    %387 = vmatpush1.bf16.msra.mxu0 0
    %388 = vmatprep.subr.bf16.mxu0 0
    %389 = vmatpush1.bf16.msra.mxu0 0
    %390 = vmatprep.subr.bf16.mxu0 0
    %391 = vmatpush1.bf16.msra.mxu0 0
    %392 = vmatprep.subr.bf16.mxu0 0
    %393 = vmatpush1.bf16.msra.mxu0 0
    %394 = vmatprep.subr.bf16.mxu0 0
    %395 = vmatpush1.bf16.msra.mxu0 0
    %396 = vmatprep.subr.bf16.mxu0 0
    %397 = vmatpush1.bf16.msra.mxu0 0
    %398 = vmatprep.subr.bf16.mxu0 0
    %399 = vmatpush1.bf16.msra.mxu0 0
    %400 = vmatprep.subr.bf16.mxu0 0
    %401 = vmatpush1.bf16.msra.mxu0 0
    %402 = vmatprep.mubr.bf16.mxu0 0
    %403 = vmatmul.mubr.bf16.gmra.mrb[0].mxu0 %v298
    %v404 = vpop.f32.mrb[0].mxu0
    %v405 = vadd.f32 %v320, %v404
    %v406 = vpop.f32.mrb[0].mxu0
    %v407 = vpop.f32.mrb[0].mxu0
    %v408 = vpop.f32.mrb[0].mxu0
    %409 = vdwg.mxu0
    %v410 = vmax.f32 %v405, 0.0
    %v411 = vpack.c.bf16 %v410, %v410
    %v412 = vld [vmem:[%s7] sm:$0xf]
    %v413 = vld [vmem:[%s7 + $0x4] sm:$0xf]
    %v414 = vld [vmem:[%s7 + $0x8] sm:$0xf]
    %v415 = vld [vmem:[%s7 + $0xc] sm:$0xf]
    %v416 = vld [vmem:[%s7 + $0x10] sm:$0xf]
    %v417 = vld [vmem:[%s7 + $0x14] sm:$0xf]
    %v418 = vld [vmem:[%s7 + $0x18] sm:$0xf]
    %v419 = vld [vmem:[%s7 + $0x1c] sm:$0xf]
    %v420 = vld [vmem:[%s8] sm:$0x1]
    %v422 = vlaneseq
    %v423 = vshrl.u32 %v422, 7
    %v424 = vsub.s32 0, %v423
    %v425 = vrot.slane %v420, %v424
    %v435 = vunpack.c.l.b16 %v412
    %v436 = vunpack.c.l.b16 %v413
    %v437 = vunpack.c.l.b16 %v414
    %v438 = vunpack.c.l.b16 %v415
    %v439 = vunpack.c.l.b16 %v416
    %v440 = vunpack.c.l.b16 %v417
    %v441 = vunpack.c.l.b16 %v418
    %v442 = vunpack.c.l.b16 %v419
    %v443 = vpack.c.b16 %v436, %v435
    %v444 = vpack.c.b16 %v438, %v437
    %v445 = vpack.c.b16 %v440, %v439
    %v446 = vpack.c.b16 %v442, %v441
    %vm451 = vcmask 523264
    %v453 = vsel %vm451, %v411, 0
    %455 = vmatprep.subr.bf16.mxu0 0
    %456 = vmatpush1.bf16.msra.mxu0 %v443
    %457 = vmatprep.subr.bf16.mxu0 0
    %458 = vmatpush1.bf16.msra.mxu0 %v444
    %459 = vmatprep.subr.bf16.mxu0 0
    %460 = vmatpush1.bf16.msra.mxu0 %v445
    %461 = vmatprep.subr.bf16.mxu0 0
    %462 = vmatpush1.bf16.msra.mxu0 %v446
    %463 = vmatprep.subr.bf16.mxu0 0
    %464 = vmatpush1.bf16.msra.mxu0 0
    %465 = vmatprep.subr.bf16.mxu0 0
    %466 = vmatpush1.bf16.msra.mxu0 0
    %467 = vmatprep.subr.bf16.mxu0 0
    %468 = vmatpush1.bf16.msra.mxu0 0
    %469 = vmatprep.subr.bf16.mxu0 0
    %470 = vmatpush1.bf16.msra.mxu0 0
    %471 = vmatprep.subr.bf16.mxu0 0
    %472 = vmatpush1.bf16.msra.mxu0 0
    %473 = vmatprep.subr.bf16.mxu0 0
    %474 = vmatpush1.bf16.msra.mxu0 0
    %475 = vmatprep.subr.bf16.mxu0 0
    %476 = vmatpush1.bf16.msra.mxu0 0
    %477 = vmatprep.subr.bf16.mxu0 0
    %478 = vmatpush1.bf16.msra.mxu0 0
    %479 = vmatprep.subr.bf16.mxu0 0
    %480 = vmatpush1.bf16.msra.mxu0 0
    %481 = vmatprep.subr.bf16.mxu0 0
    %482 = vmatpush1.bf16.msra.mxu0 0
    %483 = vmatprep.subr.bf16.mxu0 0
    %484 = vmatpush1.bf16.msra.mxu0 0
    %485 = vmatprep.subr.bf16.mxu0 0
    %486 = vmatpush1.bf16.msra.mxu0 0
    %487 = vmatprep.mubr.bf16.mxu0 0
    %488 = vmatmul.mubr.bf16.gmra.mrb[0].mxu0 %v453
    %v489 = vpop.f32.mrb[0].mxu0
    %v490 = vadd.f32 %v425, %v489
    %v491 = vpop.f32.mrb[0].mxu0
    %v492 = vpop.f32.mrb[0].mxu0
    %v493 = vpop.f32.mrb[0].mxu0
    %494 = vdwg.mxu0
    %vm495 = vcmask 64512
    %v496 = vsel %vm495, %v490, -inf
    %497 = vmax.xlane.f32.xlu0 %v496
    %v498 = vpop.xlane.xlu0 %497
    %v499 = vsub.f32 %v490, %v498
    %v500 = vmul.f32 %v499, 1.442695
    %v501 = vpow.pop %v500
    %v502 = vsel %vm495, %v501, 0.0
    %503 = vadd.xlane.f32.xlu0 %v502
    %v504 = vpop.xlane.xlu0 %503
    %v505 = vrcp.pop %v504
    %v506 = vmul.f32 %v504, %v505
    %v507 = vsub.f32 2.0, %v506
    %v508 = vmul.f32 %v505, %v507
    %v509 = vmul.f32 %v501, %v508
    %510 = vst.msk [vmem:[#allocation2] sm:$0xff] %vm495, %v509
    // Predicated region
    $region38: #{predictor_forward.1} parent=1 // pred_check
      _
    $region39: #{predictor_forward.1} parent=1 // pred_check_branch
      %512 = sbr.rel (0) target = $region41
    $region40: #{predictor_forward.1} parent=1 // pred_region
      %s514 = ssub.s32 128, 128
      %515 = vsyncadd [#allocation3], %s514
      %s517 = sshll.u32 [#allocation2], 4
      %s518 = int_to_ptr.vmem [resolvable:$true] %s517
      %520 = dma.vmem_to_hbm [thread:$0]  %s518, 128, %s9, [#allocation3]
    $region41: #{predictor_forward.1} parent=1 // pred_fallthru
      _
    // Predicated region
    $region42: #{predictor_forward.1} parent=1 // pred_check
      _
    $region43: #{predictor_forward.1} parent=1 // pred_check_branch
      %522 = sbr.rel (0) target = $region45
    $region44: #{predictor_forward.1} parent=1 // pred_region
      %523 = dma.done [#allocation3], 128
    $region45: #{predictor_forward.1} parent=1 // pred_fallthru
      _
    %524 = vsyncpa [#allocation3], 1

</llo_original>
